<compile_context>
chip_gen: v6e
topology: v6e:2x2x1
jax: 0.10.0
libtpu: 0.0.40
codegen_flags: <defaults>
</compile_context>

<pallas_src>
import functools

import jax
import jax.numpy as jnp
from jax.experimental import pallas as pl
from jax.experimental.pallas import tpu as pltpu


# --------------------------------------------------------------------------
# Fused path: one block holds the full spatial extent of `row_tile` rows.
# --------------------------------------------------------------------------
def _adain_fused_kernel(x_ref, wb_ref, o_ref, *, eps):
    # x_ref : (row_tile, HW) block in the input dtype.
    # wb_ref: (row_tile, 2) f32, column 0 = weight, column 1 = bias.
    x = x_ref[...].astype(jnp.float32)                 # cast in-kernel, not in HBM
    mean = jnp.mean(x, axis=1, keepdims=True)
    xc = x - mean
    var = jnp.mean(xc * xc, axis=1, keepdims=True)     # biased var (training=True)
    w = wb_ref[:, 0:1]
    b = wb_ref[:, 1:2]
    scale = jax.lax.rsqrt(var + eps) * w               # rsqrt -> EUP slot
    o_ref[...] = (xc * scale + b).astype(o_ref.dtype)  # store in input dtype


def _adain_fused(x2, wb, *, eps, row_tile, vmem_limit):
    BC, HW = x2.shape
    grid = (pl.cdiv(BC, row_tile),)                    # ragged last block is OK:
    return pl.pallas_call(                             # per-row stats, OOB rows never written
        functools.partial(_adain_fused_kernel, eps=eps),
        out_shape=jax.ShapeDtypeStruct((BC, HW), x2.dtype),
        grid=grid,
        in_specs=[
            pl.BlockSpec((row_tile, HW), lambda i: (i, 0)),
            pl.BlockSpec((row_tile, 2), lambda i: (i, 0)),
        ],
        out_specs=pl.BlockSpec((row_tile, HW), lambda i: (i, 0)),
        compiler_params=pltpu.CompilerParams(
            dimension_semantics=("parallel",),
            vmem_limit_bytes=vmem_limit,
        ),
    )(x2, wb)


# --------------------------------------------------------------------------
# Large-H*W path: tile the lane axis; pass 1 reduces, pass 2 normalizes.
# --------------------------------------------------------------------------
def _adain_stats_kernel(x_ref, stat_ref, *, hw, hw_tile):
    j = pl.program_id(1)
    x = x_ref[...].astype(jnp.float32)
    # Mask lanes beyond the true spatial extent on the ragged last lane block.
    col = jax.lax.broadcasted_iota(jnp.int32, x.shape, 1) + j * hw_tile
    x = jnp.where(col < hw, x, 0.0)
    s = jnp.sum(x, axis=1, keepdims=True)
    ss = jnp.sum(x * x, axis=1, keepdims=True)
    part = jnp.concatenate([s, ss], axis=1)            # (row_tile, 2)

    @pl.when(j == 0)
    def _():
        stat_ref[...] = part

    @pl.when(j > 0)
    def _():
        stat_ref[...] = stat_ref[...] + part


def _adain_apply_kernel(x_ref, ss_ref, o_ref):
    x = x_ref[...].astype(jnp.float32)
    o_ref[...] = (x * ss_ref[:, 0:1] + ss_ref[:, 1:2]).astype(o_ref.dtype)


def _adain_spatial_tiled(x2, wb, *, eps, row_tile, hw_tile, vmem_limit):
    BC, HW = x2.shape
    nb_r = pl.cdiv(BC, row_tile)
    nb_c = pl.cdiv(HW, hw_tile)

    # Pass 1: per-row sum / sum-of-squares (lane-axis reduction, accumulator
    # resident across the "arbitrary" axis via the constant output block index).
    stats = pl.pallas_call(
        functools.partial(_adain_stats_kernel, hw=HW, hw_tile=hw_tile),
        out_shape=jax.ShapeDtypeStruct((BC, 2), jnp.float32),
        grid=(nb_r, nb_c),
        in_specs=[pl.BlockSpec((row_tile, hw_tile), lambda i, j: (i, j))],
        out_specs=pl.BlockSpec((row_tile, 2), lambda i, j: (i, 0)),
        compiler_params=pltpu.CompilerParams(
            dimension_semantics=("parallel", "arbitrary"),
            vmem_limit_bytes=vmem_limit,
        ),
    )(x2)

    # Fold stats with the AdaIN affine params (tiny (BC, 2) arrays, plain XLA).
    mean = stats[:, 0:1] / HW
    var = jnp.maximum(stats[:, 1:2] / HW - mean * mean, 0.0)
    scale = jax.lax.rsqrt(var + eps) * wb[:, 0:1]
    shift = wb[:, 1:2] - mean * scale
    ss = jnp.concatenate([scale, shift], axis=1)       # (BC, 2) f32

    # Pass 2: out = x * scale + shift.
    return pl.pallas_call(
        _adain_apply_kernel,
        out_shape=jax.ShapeDtypeStruct((BC, HW), x2.dtype),
        grid=(nb_r, nb_c),
        in_specs=[
            pl.BlockSpec((row_tile, hw_tile), lambda i, j: (i, j)),
            pl.BlockSpec((row_tile, 2), lambda i, j: (i, 0)),
        ],
        out_specs=pl.BlockSpec((row_tile, hw_tile), lambda i, j: (i, j)),
        compiler_params=pltpu.CompilerParams(
            dimension_semantics=("parallel", "parallel"),
            vmem_limit_bytes=vmem_limit,
        ),
    )(x2, ss)


# --------------------------------------------------------------------------
# Wrapper
# --------------------------------------------------------------------------
def adaptive_instance_norm_2d(x, weight, bias, *, eps=1e-5, vmem_budget_bytes=None):
    """AdaptiveInstanceNorm2d forward. x: (B, C, H, W) NCHW; weight, bias: (B*C,)."""
    B, C, H, W = x.shape
    BC, HW = B * C, H * W

    # NCHW is contiguous as (B*C, H*W): free reshape, no transpose, no cast.
    x2 = x.reshape(BC, HW)
    wb = jnp.stack(
        [weight.reshape(BC).astype(jnp.float32), bias.reshape(BC).astype(jnp.float32)],
        axis=-1,
    )  # (BC, 2)

    # Per-generation VMEM budget for the data blocks (cap keeps v7x's 64 MiB safe).
    if vmem_budget_bytes is None:
        try:
            cap = pltpu.get_tpu_info().vmem_capacity_bytes
        except Exception:  # conservative fallback (v7x-sized)
            cap = 64 << 20
        vmem_budget_bytes = min(cap // 2, 40 << 20)
    vmem_limit = int(min(vmem_budget_bytes + (16 << 20), 128 << 20))

    itemsize = x.dtype.itemsize
    # Per row of a block: double-buffered in + out blocks + f32 temporaries.
    bytes_per_row = HW * (2 * itemsize + 2 * itemsize + 8)

    if 8 * bytes_per_row <= vmem_budget_bytes:
        # Fused single-pass path: full spatial extent per block.
        row_tile = max(8, (vmem_budget_bytes // bytes_per_row) // 8 * 8)
        # Keep >=2 grid steps once there is enough work (v7x: 2 TensorCores).
        half_rows = -(-(-(-BC // 2)) // 8) * 8          # round_up(cdiv(BC, 2), 8)
        row_tile = int(min(row_tile, max(8, half_rows)))
        out2 = _adain_fused(x2, wb, eps=eps, row_tile=row_tile, vmem_limit=vmem_limit)
    else:
        # Large-H*W path: tile the lane axis (multiple of 128) and run two passes.
        hw_tile = max(128, (vmem_budget_bytes // (8 * (4 * itemsize + 8))) // 128 * 128)
        hw_tile = int(min(hw_tile, -(-HW // 128) * 128))
        out2 = _adain_spatial_tiled(
            x2, wb, eps=eps, row_tile=8, hw_tile=hw_tile, vmem_limit=vmem_limit
        )

    return out2.reshape(B, C, H, W)


# --------------------------------------------------------------------------
# Reference + tests
# --------------------------------------------------------------------------
def _adain_reference(x, weight, bias, eps=1e-5):
    # Pure-JAX reference of F.batch_norm(view(1, B*C, H, W), ..., training=True).
    B, C, H, W = x.shape
    xr = x.reshape(B * C, H * W).astype(jnp.float32)
    mean = xr.mean(axis=1, keepdims=True)
    var = ((xr - mean) ** 2).mean(axis=1, keepdims=True)
    out = (xr - mean) / jnp.sqrt(var + eps)
    out = out * weight.reshape(-1, 1).astype(jnp.float32) + bias.reshape(-1, 1).astype(jnp.float32)
    return out.reshape(B, C, H, W)


if __name__ == "__main__":
    key = jax.random.PRNGKey(0)

    # ---- Test 1: small f32 input, fused path (lane-dense HW = 256) ----------
    B, C, H, W = 2, 4, 16, 16
    k1, k2, k3, key = jax.random.split(key, 4)
    x = jax.random.normal(k1, (B, C, H, W), jnp.float32)
    w = 1.0 + 0.1 * jax.random.normal(k2, (B * C,), jnp.float32)
    b = 0.1 * jax.random.normal(k3, (B * C,), jnp.float32)

    out = adaptive_instance_norm_2d(x, w, b)
    jax.block_until_ready(out)
    assert out.shape == (B, C, H, W) and out.dtype == x.dtype
    err = float(jnp.max(jnp.abs(out.astype(jnp.float32) - _adain_reference(x, w, b))))
    assert err < 1e-4, f"fused f32 path error: {err}"

    # ---- Test 2: bf16 input, odd spatial (14x14 -> masked stores), more rows -
    B2, C2, H2, W2 = 2, 32, 14, 14
    k1, k2, k3, key = jax.random.split(key, 4)
    xf = jax.random.normal(k1, (B2, C2, H2, W2), jnp.float32)
    xb = xf.astype(jnp.bfloat16)
    w2 = 1.0 + 0.1 * jax.random.normal(k2, (B2 * C2,), jnp.float32)
    b2 = 0.1 * jax.random.normal(k3, (B2 * C2,), jnp.float32)

    out2 = adaptive_instance_norm_2d(xb, w2, b2)
    jax.block_until_ready(out2)
    assert out2.dtype == jnp.bfloat16 and out2.shape == xb.shape
    ref2 = _adain_reference(xb.astype(jnp.float32), w2, b2)
    err2 = float(jnp.max(jnp.abs(out2.astype(jnp.float32) - ref2)))
    assert err2 < 5e-2, f"bf16 path error: {err2}"

    # ---- Test 3: force the spatial-tiled (large-H*W) path with small tiles ---
    B3, C3, H3, W3 = 2, 8, 16, 24          # HW = 384; hw_tile = 256 -> ragged last lane block
    k1, k2, k3, key = jax.random.split(key, 4)
    x3 = jax.random.normal(k1, (B3, C3, H3, W3), jnp.float32)
    w3 = 1.0 + 0.1 * jax.random.normal(k2, (B3 * C3,), jnp.float32)
    b3 = 0.1 * jax.random.normal(k3, (B3 * C3,), jnp.float32)
    wb3 = jnp.stack([w3, b3], axis=-1)
    out3 = _adain_spatial_tiled(
        x3.reshape(B3 * C3, H3 * W3), wb3, eps=1e-5,
        row_tile=8, hw_tile=256, vmem_limit=32 << 20,
    ).reshape(B3, C3, H3, W3)
    jax.block_until_ready(out3)
    err3 = float(jnp.max(jnp.abs(out3 - _adain_reference(x3, w3, b3))))
    assert err3 < 1e-3, f"spatial-tiled path error: {err3}"

    assert bool(jnp.all(jnp.isfinite(out)))
    print("KERNEL_OK")
</pallas_src>

<mosaic_0001>
module attributes {stable_mosaic.version = 11 : i64} {
  func.func @_adain_fused_kernel(%arg0: i32, %arg1: memref<8x256xf32, #tpu.memory_space<vmem>>, %arg2: memref<8x2xf32, #tpu.memory_space<vmem>>, %arg3: memref<8x256xf32, #tpu.memory_space<vmem>>) attributes {dimension_semantics = [#tpu.dimension_semantics<parallel>], iteration_bounds = array<i64: 1>, scalar_prefetch = 0 : i64, scratch_operands = 0 : i64, tpu.core_type = #tpu.core_type<tc>, window_params = [{transform_indices = @transform_0, window_bounds = array<i64: 8, 256>}, {transform_indices = @transform_1, window_bounds = array<i64: 8, 2>}, {transform_indices = @transform_2, window_bounds = array<i64: 8, 256>}]} {
    %c0 = arith.constant 0 : index
    %c0_0 = arith.constant 0 : index
    %0 = vector.load %arg1[%c0, %c0_0] : memref<8x256xf32, #tpu.memory_space<vmem>>, vector<8x256xf32>
    %cst = arith.constant dense<0.000000e+00> : vector<8xf32>
    %1 = vector.multi_reduction <add>, %0, %cst [1] : vector<8x256xf32> to vector<8xf32>
    %2 = vector.shape_cast %1 : vector<8xf32> to vector<8x1xf32>
    %cst_1 = arith.constant 2.560000e+02 : f32
    %3 = vector.broadcast %cst_1 : f32 to vector<8x1xf32>
    %4 = arith.divf %2, %3 : vector<8x1xf32>
    %5 = vector.broadcast %4 : vector<8x1xf32> to vector<8x256xf32>
    %6 = arith.subf %0, %5 : vector<8x256xf32>
    %7 = arith.mulf %6, %6 : vector<8x256xf32>
    %cst_2 = arith.constant dense<0.000000e+00> : vector<8xf32>
    %8 = vector.multi_reduction <add>, %7, %cst_2 [1] : vector<8x256xf32> to vector<8xf32>
    %9 = vector.shape_cast %8 : vector<8xf32> to vector<8x1xf32>
    %cst_3 = arith.constant 2.560000e+02 : f32
    %10 = vector.broadcast %cst_3 : f32 to vector<8x1xf32>
    %11 = arith.divf %9, %10 : vector<8x1xf32>
    %c0_4 = arith.constant 0 : index
    %c0_5 = arith.constant 0 : index
    %12 = vector.load %arg2[%c0_4, %c0_5] : memref<8x2xf32, #tpu.memory_space<vmem>>, vector<8x1xf32>
    %c0_6 = arith.constant 0 : index
    %c1 = arith.constant 1 : index
    %13 = vector.load %arg2[%c0_6, %c1] : memref<8x2xf32, #tpu.memory_space<vmem>>, vector<8x1xf32>
    %cst_7 = arith.constant 9.99999974E-6 : f32
    %14 = vector.broadcast %cst_7 : f32 to vector<8x1xf32>
    %15 = arith.addf %11, %14 : vector<8x1xf32>
    %16 = math.rsqrt %15 : vector<8x1xf32>
    %17 = arith.mulf %16, %12 : vector<8x1xf32>
    %18 = vector.broadcast %17 : vector<8x1xf32> to vector<8x256xf32>
    %19 = arith.mulf %6, %18 : vector<8x256xf32>
    %20 = vector.broadcast %13 : vector<8x1xf32> to vector<8x256xf32>
    %21 = arith.addf %19, %20 : vector<8x256xf32>
    %c0_8 = arith.constant 0 : index
    %c0_9 = arith.constant 0 : index
    %22 = vector.load %arg3[%c0_8, %c0_9] : memref<8x256xf32, #tpu.memory_space<vmem>>, vector<8x256xf32>
    tpu.vector_store %arg3[%c0_8, %c0_9], %21 {strides = array<i32>} : memref<8x256xf32, #tpu.memory_space<vmem>>, vector<8x256xf32>,
    return
  }
  func.func @transform_0(%arg0: i32) -> (i32, i32) {
    %c0_i32 = arith.constant 0 : i32
    %c0_i32_0 = arith.constant 0 : i32
    return %arg0, %c0_i32 : i32, i32
  }
  func.func @transform_1(%arg0: i32) -> (i32, i32) {
    %c0_i32 = arith.constant 0 : i32
    %c0_i32_0 = arith.constant 0 : i32
    return %arg0, %c0_i32 : i32, i32
  }
  func.func @transform_2(%arg0: i32) -> (i32, i32) {
    %c0_i32 = arith.constant 0 : i32
    %c0_i32_0 = arith.constant 0 : i32
    return %arg0, %c0_i32 : i32, i32
  }
}

</mosaic_0001>

<llo_original>
// kernel: tpu_custom_call.1
$region0: #{tpu_custom_call.1}
  #allocation0 [shape = 'u32[]', space=smem, size = 0x4, offset = 0x4, fixed_abs, tag = 'smem constant byte address 0x4 - core index']
  #allocation1 [shape = 'u32[144,128]{1,0:T(1,128)}', space=vmem, size = 0x12000, scoped, tag = 'internal scratch']
  %s0 = inlined_call_operand.hbm [shape: f32[8,256], index: 0, kind: input, shape index: {}]
  %s1 = inlined_call_operand.vmem [shape: f32[8,2], index: 1, kind: input, shape index: {}]
  %s2 = inlined_call_operand.hbm [shape: f32[8,256], index: 2, kind: output, shape index: {}]
  %s3 = sld [smem:[#allocation0]]
  $region22: #{tpu_custom_call.1} parent=0
    _
  %s5 = ssub.s32 1, %s3
  %s6 = scalar_select 0, %s5, %s3
  $region1: #{tpu_custom_call.1} parent=0
    #allocation2 [shape = 'u8[8192]{0}', space=vmem, size = 0x2000, scoped, tag = 'input window, operand 0, single buffered']
    #allocation3 [shape = 's32[1]{0}', space=sflag, size = 0x4, scoped, tag = 'scoped memory for tpu_custom_call.1']
    #allocation4 [shape = 's32[1]{0}', space=sflag, size = 0x4, scoped, tag = 'scoped memory for tpu_custom_call.1']
    #allocation5 [shape = 'u8[8192]{0}', space=vmem, size = 0x2000, scoped, tag = 'output window, operand 0, single buffered']
    %7 = vsyncpa [#allocation3], 0
    %8 = vsyncpa [#allocation4], 0
    // Predicated region
    $region2: #{tpu_custom_call.1} parent=1 // pred_check
      _
    $region3: #{tpu_custom_call.1} parent=1 // pred_check_branch
      %10 = sbr.rel (0) target = $region5
    $region4: #{tpu_custom_call.1} parent=1 // pred_region
      %s12 = ssub.s32 256, 256
      %13 = vsyncadd [#allocation3], %s12
      %s15 = sshll.u32 [#allocation2], 4
      %s16 = int_to_ptr.vmem [resolvable:$true] %s15
      %18 = dma.hbm_to_vmem [thread:$0]  %s0, 256, %s16, [#allocation3]
    $region5: #{tpu_custom_call.1} parent=1 // pred_fallthru
      _
    // Predicated region
    $region6: #{tpu_custom_call.1} parent=1 // pred_check
      _
    $region7: #{tpu_custom_call.1} parent=1 // pred_check_branch
      %20 = sbr.rel (0) target = $region9
    $region8: #{tpu_custom_call.1} parent=1 // pred_region
      _
    $region9: #{tpu_custom_call.1} parent=1 // pred_fallthru
      _
    // Predicated region
    $region10: #{tpu_custom_call.1} parent=1 // pred_check
      _
    $region11: #{tpu_custom_call.1} parent=1 // pred_check_branch
      %22 = sbr.rel (0) target = $region13
    $region12: #{tpu_custom_call.1} parent=1 // pred_region
      %23 = dma.done [#allocation3], 256
    $region13: #{tpu_custom_call.1} parent=1 // pred_fallthru
      _
    %v24 = vld [vmem:[#allocation2] sm:$0xff]
    %v25 = vld [vmem:[#allocation2 + $0x8] sm:$0xff]
    %v26 = vadd.f32 %v24, %v25
    %27 = vadd.xlane.f32.xlu0 %v26
    %v28 = vpop.xlane.xlu0 %27
    %v29 = vrcp.pop 256.0
    %v30 = vmul.f32 %v28, %v29
    %v31 = vsub.f32 %v24, %v30
    %v32 = vsub.f32 %v25, %v30
    %v33 = vmul.f32 %v31, %v31
    %v34 = vmul.f32 %v32, %v32
    %v35 = vadd.f32 %v33, %v34
    %36 = vadd.xlane.f32.xlu0 %v35
    %v37 = vpop.xlane.xlu0 %36
    %v38 = vmul.f32 %v37, %v29
    %v39 = vld [vmem:[%s1] sm:$0xff]
    %v40 = vadd.f32 %v38, 1e-05
    %v41 = vrsqrt.pop %v40
    %v42 = vmul.f32 %v41, %v39
    %44 = vset.pattern.permute.xlu0 0
    %45 = vperm.xlu0 %44, %v42
    %v46 = vpop.permute.xlu0 %45
    %v48 = vmul.f32 %v31, %v46
    %v49 = vmul.f32 %v32, %v46
    %51 = vset.pattern.permute.xlu0 1
    %52 = vperm.xlu0 %51, %v39
    %v53 = vpop.permute.xlu0 %52
    %v55 = vadd.f32 %v48, %v53
    %v56 = vadd.f32 %v49, %v53
    %57 = vst [vmem:[#allocation5] sm:$0xff] %v55
    %58 = vst [vmem:[#allocation5 + $0x8] sm:$0xff] %v56
    // Predicated region
    $region14: #{tpu_custom_call.1} parent=1 // pred_check
      _
    $region15: #{tpu_custom_call.1} parent=1 // pred_check_branch
      %60 = sbr.rel (0) target = $region17
    $region16: #{tpu_custom_call.1} parent=1 // pred_region
      %s62 = ssub.s32 256, 256
      %63 = vsyncadd [#allocation4], %s62
      %s65 = sshll.u32 [#allocation5], 4
      %s66 = int_to_ptr.vmem [resolvable:$true] %s65
      %68 = dma.vmem_to_hbm [thread:$0]  %s66, 256, %s2, [#allocation4]
    $region17: #{tpu_custom_call.1} parent=1 // pred_fallthru
      _
    // Predicated region
    $region18: #{tpu_custom_call.1} parent=1 // pred_check
      _
    $region19: #{tpu_custom_call.1} parent=1 // pred_check_branch
      %70 = sbr.rel (0) target = $region21
    $region20: #{tpu_custom_call.1} parent=1 // pred_region
      %71 = dma.done [#allocation4], 256
    $region21: #{tpu_custom_call.1} parent=1 // pred_fallthru
      _
    %72 = vsyncpa [#allocation3], 1
    %73 = vsyncpa [#allocation4], 1

</llo_original>
